<compile_context>
chip_gen: v6e
topology: v6e:2x2x1
jax: 0.10.0
libtpu: 0.0.40
codegen_flags: <defaults>
</compile_context>

<pallas_src>
import functools

import jax
import jax.numpy as jnp
from jax import lax
from jax.experimental import pallas as pl
from jax.experimental.pallas import tpu as pltpu

EPS = 1e-08
GAMMA = 2          # kept as explicit squares (q*q) in-kernel
LANES = 128
SUBLANES = 8
MAX_TILE_ROWS = 4096   # (4096,128) f32 = 2 MiB per input block
NUM_SPLITS = 2         # leading "parallel" grid axis (one per TC on v7x)


def _round_up(a, b):
    return -(-a // b) * b


def _cdiv(a, b):
    return -(-a // b)


def _focal_loss_kernel(x_ref, t_ref, o_ref, *, n_valid, tile_rows, mask_needed):
    c = pl.program_id(0)           # core-split index (parallel axis)
    i = pl.program_id(1)           # reduction step within this split
    n_i = pl.num_programs(1)

    # o_ref is this split's resident (8,128) accumulator: same output block
    # index for every i, so it stays in VMEM across the reduction axis.
    @pl.when(i == 0)
    def _():
        o_ref[...] = jnp.zeros_like(o_ref)

    # forward semantics of the PyTorch module (clamp -> sigmoid -> clamp(t)):
    x = jnp.clip(x_ref[...], EPS, 1.0 - EPS)
    t = jnp.maximum(t_ref[...], EPS)

    # Softplus rewrite: with e = exp(-x), denom = 1 + e, s = log(denom):
    #   p        = sigmoid(x) = 1/denom
    #   log(p)   = -s
    #   log(1-p) = -x - s
    #   1 - p    = e / denom
    # so  -[(1-p)^2 t log(p) + p^2 (1-t) log(1-p)]
    #   = (1-p)^2 * t * s + p^2 * (1-t) * (x + s)     (already-negated term)
    e = jnp.exp(-x)
    denom = 1.0 + e
    p = pl.reciprocal(denom)       # exact (approx=False) to keep f32 accuracy
    s = jnp.log(denom)
    one_m_p = e * p
    term = (one_m_p * one_m_p) * t * s + (p * p) * (1.0 - t) * (x + s)

    def fold(v):
        # Partial-reduce (tile_rows,128) -> (8,128): vreg-group adds on the
        # VPU only; the single cross-lane reduce is deferred to the wrapper.
        return v.reshape(-1, SUBLANES, LANES).sum(axis=0)

    if mask_needed:
        # Only tiles overlapping the padded tail pay for the iota mask.
        tile_elems = tile_rows * LANES
        base = (c * n_i + i) * tile_elems
        pad_tile = base + tile_elems > n_valid

        @pl.when(pad_tile)
        def _():
            row = lax.broadcasted_iota(jnp.int32, (tile_rows, LANES), 0)
            lane = lax.broadcasted_iota(jnp.int32, (tile_rows, LANES), 1)
            idx = base + row * LANES + lane
            o_ref[...] += fold(jnp.where(idx < n_valid, term, 0.0))

        @pl.when(jnp.logical_not(pad_tile))
        def _():
            o_ref[...] += fold(term)
    else:
        o_ref[...] += fold(term)


def focal_loss(inp, target):
    """Pallas implementation of FocalLoss.forward. Returns a scalar f32."""
    assert inp.shape == target.shape
    x = jnp.asarray(inp, jnp.float32).reshape(-1)
    t = jnp.asarray(target, jnp.float32).reshape(-1)
    n = x.shape[0]

    # Choose a lane-dense [rows, 128] layout with a tile as large as sensible
    # (caps total pipelined VMEM at ~8 MiB: portable across v5e/v6e/v7x).
    rows_min = _cdiv(n, LANES)
    tile_rows = min(MAX_TILE_ROWS,
                    max(SUBLANES, _round_up(_cdiv(rows_min, NUM_SPLITS), SUBLANES)))
    tiles_per_split = _cdiv(rows_min, NUM_SPLITS * tile_rows)
    rows_total = NUM_SPLITS * tiles_per_split * tile_rows
    total = rows_total * LANES
    n_pad = total - n

    if n_pad:
        x = jnp.pad(x, (0, n_pad))
        t = jnp.pad(t, (0, n_pad))
    x2 = x.reshape(rows_total, LANES)
    t2 = t.reshape(rows_total, LANES)

    in_spec = pl.BlockSpec((tile_rows, LANES),
                           lambda c, i: (c * tiles_per_split + i, 0))
    out_spec = pl.BlockSpec((SUBLANES, LANES), lambda c, i: (c, 0))

    kernel = functools.partial(_focal_loss_kernel,
                               n_valid=n,
                               tile_rows=tile_rows,
                               mask_needed=bool(n_pad))

    partials = pl.pallas_call(
        kernel,
        out_shape=jax.ShapeDtypeStruct((NUM_SPLITS * SUBLANES, LANES), jnp.float32),
        grid_spec=pltpu.PrefetchScalarGridSpec(
            num_scalar_prefetch=0,
            grid=(NUM_SPLITS, tiles_per_split),
            in_specs=[in_spec, in_spec],
            out_specs=out_spec,
        ),
        compiler_params=pltpu.CompilerParams(
            dimension_semantics=("parallel", "arbitrary"),
        ),
    )(x2, t2)

    # Epilogue: single tiny reduce over the (NUM_SPLITS*8, 128) partials.
    # (term above is already the negated loss contribution, so no final '-'.)
    return jnp.sum(partials)


def _focal_loss_ref(inp, target):
    x = jnp.clip(jnp.asarray(inp, jnp.float32), EPS, 1.0 - EPS)
    p = jax.nn.sigmoid(x)
    t = jnp.maximum(jnp.asarray(target, jnp.float32), EPS)
    return -jnp.sum((1.0 - p) ** GAMMA * t * jnp.log(p)
                    + p ** GAMMA * (1.0 - t) * jnp.log(1.0 - p))


if __name__ == "__main__":
    key = jax.random.PRNGKey(0)
    k1, k2 = jax.random.split(key)
    # Small NCHW-like shapes: batch=2, channels=4, spatial=16x16.
    x = jax.random.normal(k1, (2, 4, 16, 16), dtype=jnp.float32)
    tgt = jax.random.uniform(k2, (2, 4, 16, 16), dtype=jnp.float32)

    loss = jax.block_until_ready(focal_loss(x, tgt))
    ref = jax.block_until_ready(_focal_loss_ref(x, tgt))

    assert jnp.allclose(loss, ref, rtol=1e-5, atol=1e-4), (loss, ref)
    print("KERNEL_OK")
</pallas_src>

<mosaic_0001>
module attributes {stable_mosaic.version = 11 : i64} {
  func.func @_focal_loss_kernel(%arg0: i32, %arg1: i32, %arg2: memref<8x128xf32, #tpu.memory_space<vmem>>, %arg3: memref<8x128xf32, #tpu.memory_space<vmem>>, %arg4: memref<8x128xf32, #tpu.memory_space<vmem>>) attributes {dimension_semantics = [#tpu.dimension_semantics<parallel>, #tpu.dimension_semantics<arbitrary>], iteration_bounds = array<i64: 2, 1>, scalar_prefetch = 0 : i64, scratch_operands = 0 : i64, tpu.core_type = #tpu.core_type<tc>, window_params = [{transform_indices = @transform_0, window_bounds = array<i64: 8, 128>}, {transform_indices = @transform_1, window_bounds = array<i64: 8, 128>}, {transform_indices = @transform_2, window_bounds = array<i64: 8, 128>}]} {
    %c0_i32 = arith.constant 0 : i32
    %0 = arith.cmpi eq, %arg1, %c0_i32 : i32
    %1 = arith.extui %0 : i1 to i32
    %c0_i32_0 = arith.constant 0 : i32
    %2 = arith.cmpi ne, %1, %c0_i32_0 : i32
    scf.if %2 {
      %cst_14 = arith.constant 0.000000e+00 : f32
      %34 = vector.broadcast %cst_14 : f32 to vector<8x128xf32>
      %c0_15 = arith.constant 0 : index
      %c0_16 = arith.constant 0 : index
      %35 = vector.load %arg4[%c0_15, %c0_16] : memref<8x128xf32, #tpu.memory_space<vmem>>, vector<8x128xf32>
      tpu.vector_store %arg4[%c0_15, %c0_16], %34 {strides = array<i32>} : memref<8x128xf32, #tpu.memory_space<vmem>>, vector<8x128xf32>,
    } else {
    }
    %c0 = arith.constant 0 : index
    %c0_1 = arith.constant 0 : index
    %3 = vector.load %arg2[%c0, %c0_1] : memref<8x128xf32, #tpu.memory_space<vmem>>, vector<8x128xf32>
    %cst = arith.constant 9.99999993E-9 : f32
    %cst_2 = arith.constant 1.000000e+00 : f32
    %4 = vector.broadcast %cst : f32 to vector<8x128xf32>
    %5 = arith.maximumf %4, %3 : vector<8x128xf32>
    %6 = vector.broadcast %cst_2 : f32 to vector<8x128xf32>
    %7 = arith.minimumf %6, %5 : vector<8x128xf32>
    %c0_3 = arith.constant 0 : index
    %c0_4 = arith.constant 0 : index
    %8 = vector.load %arg3[%c0_3, %c0_4] : memref<8x128xf32, #tpu.memory_space<vmem>>, vector<8x128xf32>
    %cst_5 = arith.constant 9.99999993E-9 : f32
    %9 = vector.broadcast %cst_5 : f32 to vector<8x128xf32>
    %10 = arith.maximumf %8, %9 : vector<8x128xf32>
    %cst_6 = arith.constant 0.000000e+00 : f32
    %11 = vector.broadcast %cst_6 : f32 to vector<8x128xf32>
    %12 = arith.subf %11, %7 : vector<8x128xf32>
    %13 = math.exp %12 : vector<8x128xf32>
    %cst_7 = arith.constant 1.000000e+00 : f32
    %14 = vector.broadcast %cst_7 : f32 to vector<8x128xf32>
    %15 = arith.addf %14, %13 : vector<8x128xf32>
    %16 = tpu.reciprocal %15 : vector<8x128xf32> -> vector<8x128xf32>
    %17 = math.log %15 : vector<8x128xf32>
    %18 = arith.mulf %13, %16 : vector<8x128xf32>
    %19 = arith.mulf %18, %18 : vector<8x128xf32>
    %20 = arith.mulf %19, %10 : vector<8x128xf32>
    %21 = arith.mulf %20, %17 : vector<8x128xf32>
    %22 = arith.mulf %16, %16 : vector<8x128xf32>
    %cst_8 = arith.constant 1.000000e+00 : f32
    %23 = vector.broadcast %cst_8 : f32 to vector<8x128xf32>
    %24 = arith.subf %23, %10 : vector<8x128xf32>
    %25 = arith.mulf %22, %24 : vector<8x128xf32>
    %26 = arith.addf %7, %17 : vector<8x128xf32>
    %27 = arith.mulf %25, %26 : vector<8x128xf32>
    %28 = arith.addf %21, %27 : vector<8x128xf32>
    %c0_9 = arith.constant 0 : index
    %c0_10 = arith.constant 0 : index
    %29 = vector.load %arg4[%c0_9, %c0_10] : memref<8x128xf32, #tpu.memory_space<vmem>>, vector<8x128xf32>
    %30 = vector.shape_cast %28 : vector<8x128xf32> to vector<1x8x128xf32>
    %cst_11 = arith.constant dense<0.000000e+00> : vector<8x128xf32>
    %31 = vector.multi_reduction <add>, %30, %cst_11 [0] : vector<1x8x128xf32> to vector<8x128xf32>
    %32 = arith.addf %29, %31 : vector<8x128xf32>
    %c0_12 = arith.constant 0 : index
    %c0_13 = arith.constant 0 : index
    %33 = vector.load %arg4[%c0_12, %c0_13] : memref<8x128xf32, #tpu.memory_space<vmem>>, vector<8x128xf32>
    tpu.vector_store %arg4[%c0_12, %c0_13], %32 {strides = array<i32>} : memref<8x128xf32, #tpu.memory_space<vmem>>, vector<8x128xf32>,
    return
  }
  func.func @transform_0(%arg0: i32, %arg1: i32) -> (i32, i32) {
    %c1_i32 = arith.constant 1 : i32
    %0 = arith.muli %arg0, %c1_i32 : i32
    %1 = arith.addi %0, %arg1 : i32
    %c0_i32 = arith.constant 0 : i32
    %c0_i32_0 = arith.constant 0 : i32
    return %1, %c0_i32 : i32, i32
  }
  func.func @transform_1(%arg0: i32, %arg1: i32) -> (i32, i32) {
    %c1_i32 = arith.constant 1 : i32
    %0 = arith.muli %arg0, %c1_i32 : i32
    %1 = arith.addi %0, %arg1 : i32
    %c0_i32 = arith.constant 0 : i32
    %c0_i32_0 = arith.constant 0 : i32
    return %1, %c0_i32 : i32, i32
  }
  func.func @transform_2(%arg0: i32, %arg1: i32) -> (i32, i32) {
    %c0_i32 = arith.constant 0 : i32
    %c0_i32_0 = arith.constant 0 : i32
    return %arg0, %c0_i32 : i32, i32
  }
}

</mosaic_0001>

<llo_original>
// kernel: tpu_custom_call.1
$region0: #{tpu_custom_call.1}
  #allocation0 [shape = 'u32[]', space=smem, size = 0x4, offset = 0x4, fixed_abs, tag = 'smem constant byte address 0x4 - core index']
  #allocation1 [shape = 'u32[144,128]{1,0:T(1,128)}', space=vmem, size = 0x12000, scoped, tag = 'internal scratch']
  %s0 = inlined_call_operand.hbm [shape: f32[16,128], index: 0, kind: input, shape index: {}]
  %s1 = inlined_call_operand.hbm [shape: f32[16,128], index: 1, kind: input, shape index: {}]
  %s2 = inlined_call_operand.hbm [shape: f32[16,128], index: 2, kind: output, shape index: {}]
  %s3 = sld [smem:[#allocation0]]
  $region53: #{tpu_custom_call.1} parent=0
    _
  %s5 = ssub.s32 1, %s3
  %s6 = scalar_select 0, %s5, %s3
  $region1: #{tpu_custom_call.1} parent=0
    #allocation2 [shape = 'u8[8192]{0}', space=vmem, size = 0x2000, scoped, tag = 'input window, operand 0']
    #allocation3 [shape = 's32[2]{0}', space=sflag, size = 0x8, scoped, tag = 'scoped memory for tpu_custom_call.1']
    #allocation4 [shape = 's32[2]{0}', space=sflag, size = 0x8, scoped, tag = 'scoped memory for tpu_custom_call.1']
    #allocation5 [shape = 'u8[8192]{0}', space=vmem, size = 0x2000, scoped, tag = 'input window, operand 1']
    #allocation6 [shape = 's32[2]{0}', space=sflag, size = 0x8, scoped, tag = 'scoped memory for tpu_custom_call.1']
    #allocation7 [shape = 'u8[8192]{0}', space=vmem, size = 0x2000, scoped, tag = 'output window, operand 0']
    %7 = vsyncpa [#allocation3], 0
    %s8 = scalar_lea.sflag [#allocation3], 1
    %9 = vsyncpa %s8, 0
    %10 = vsyncpa [#allocation6], 0
    %s11 = scalar_lea.sflag [#allocation6], 1
    %12 = vsyncpa %s11, 0
    %13 = vsyncpa [#allocation4], 0
    %s14 = scalar_lea.sflag [#allocation4], 1
    %15 = vsyncpa %s14, 0
    loop: start=0, step=1, limit=4
    $region2: #{tpu_custom_call.1} parent=1 // loop_pre_header
      _
    $region3: #{tpu_custom_call.1} parent=1 // loop_header
      %s17 = sphi 0, %s21
      %p18 = scmp.ge.s32.totalorder %s17, 4
      %s24 = sphi 0, %s36
      %s25 = sphi 0, %s32
      %s26 = sphi 0, %s24
      %s27 = sphi 0, %s25
      %s28 = sphi 0, %s26
      %s29 = sphi 0, %s27
      %s41 = sphi 0, %s43
      %s44 = sphi 0, %s41
      %s45 = sphi 0, %s44
      %s61 = sphi 0, %s45
      %s69 = sphi 0, %s71
      %s72 = sphi 0, %s69
      %s73 = sphi 0, %s72
      %s89 = sphi 0, %s73
      %s95 = sphi 0, %s97
      %s98 = sphi 0, %s95
      %s99 = sphi 0, %s98
      %s115 = sphi 0, %s99
    $region4: #{tpu_custom_call.1} parent=1 // loop_header_branch
      %20 = sbr.rel (%p18) target = $region8
    $region5: #{tpu_custom_call.1} parent=1 // loop_body
      %s22 = ssub.s32 %s17, 1
      %s23 = ssub.s32 %s17, 2
      %s30 = sadd.s32 1, %s25
      %p31 = scmp.ge.s32.totalorder %s30, 1
      %s32 = scalar_select %p31, 0, %s30
      %s33 = sadd.s32 1, %s24
      %s34 = scalar_select %p31, %s33, %s24
      %p35 = scmp.ge.s32.totalorder %s34, 2
      %s36 = scalar_select %p35, 0, %s34
      %s37 = sadd.s32 %s24, %s25
      %s38 = sadd.s32 %s36, %s32
      %s39 = ssub.s32 %s37, %s38
      %p40 = scmp.eq.s32.totalorder %s39, 0
      %s42 = sadd.s32 %s41, 1
      %s43 = scalar_select %p40, %s41, %s42
      %p46 = pneg %p40
      %p47 = scmp.eq.s32.totalorder %s17, 1
      %p48 = por %p46, %p47
      %p49 = scmp.ne.s32.totalorder %s41, %s44
      %p50 = scmp.eq.s32.totalorder %s17, 0
      %p51 = por %p49, %p50
      %p52 = scmp.ne.s32.totalorder %s41, %s44
      %p53 = scmp.eq.s32.totalorder %s22, 1
      %p54 = por %p52, %p53
      %p55 = scmp.ne.s32.totalorder %s44, %s45
      %p56 = scmp.eq.s32.totalorder %s22, 0
      %p57 = por %p55, %p56
      %p58 = scmp.ne.s32.totalorder %s44, %s45
      %p59 = scmp.eq.s32.totalorder %s23, 1
      %p60 = por %p58, %p59
      %p62 = scmp.ne.s32.totalorder %s45, %s61
      %p63 = scmp.eq.s32.totalorder %s23, 0
      %p64 = por %p62, %p63
      %s65 = sadd.s32 %s24, %s25
      %s66 = sadd.s32 %s36, %s32
      %s67 = ssub.s32 %s65, %s66
      %p68 = scmp.eq.s32.totalorder %s67, 0
      %s70 = sadd.s32 %s69, 1
      %s71 = scalar_select %p68, %s69, %s70
      %p74 = pneg %p68
      %p75 = scmp.eq.s32.totalorder %s17, 1
      %p76 = por %p74, %p75
      %p77 = scmp.ne.s32.totalorder %s69, %s72
      %p78 = scmp.eq.s32.totalorder %s17, 0
      %p79 = por %p77, %p78
      %p80 = scmp.ne.s32.totalorder %s69, %s72
      %p81 = scmp.eq.s32.totalorder %s22, 1
      %p82 = por %p80, %p81
      %p83 = scmp.ne.s32.totalorder %s72, %s73
      %p84 = scmp.eq.s32.totalorder %s22, 0
      %p85 = por %p83, %p84
      %p86 = scmp.ne.s32.totalorder %s72, %s73
      %p87 = scmp.eq.s32.totalorder %s23, 1
      %p88 = por %p86, %p87
      %p90 = scmp.ne.s32.totalorder %s73, %s89
      %p91 = scmp.eq.s32.totalorder %s23, 0
      %p92 = por %p90, %p91
      %s93 = ssub.s32 %s24, %s36
      %p94 = scmp.eq.s32.totalorder %s93, 0
      %s96 = sadd.s32 %s95, 1
      %s97 = scalar_select %p94, %s95, %s96
      %p100 = pneg %p94
      %p101 = scmp.eq.s32.totalorder %s17, 1
      %p102 = por %p100, %p101
      %p103 = scmp.ne.s32.totalorder %s95, %s98
      %p104 = scmp.eq.s32.totalorder %s17, 0
      %p105 = por %p103, %p104
      %p106 = scmp.ne.s32.totalorder %s95, %s98
      %p107 = scmp.eq.s32.totalorder %s22, 1
      %p108 = por %p106, %p107
      %p109 = scmp.ne.s32.totalorder %s98, %s99
      %p110 = scmp.eq.s32.totalorder %s22, 0
      %p111 = por %p109, %p110
      %p112 = scmp.ne.s32.totalorder %s98, %s99
      %p113 = scmp.eq.s32.totalorder %s23, 1
      %p114 = por %p112, %p113
      %p116 = scmp.ne.s32.totalorder %s99, %s115
      %p117 = scmp.eq.s32.totalorder %s23, 0
      %p118 = por %p116, %p117
      %p119 = scmp.le.s32.totalorder 1, %s17
      %p120 = scmp.lt.s32.totalorder %s17, 3
      %p121 = pnand %p119, %p120
      %p122 = pneg %p121
      // Predicated region
      $region9: #{tpu_custom_call.1} parent=5 // pred_check
        _
      $region10: #{tpu_custom_call.1} parent=5 // pred_check_branch
        %124 = sbr.rel (%p121) target = $region12
      $region11: #{tpu_custom_call.1} parent=5 // pred_region
        %s125 = ssub.s32 %s17, 1
      $region12: #{tpu_custom_call.1} parent=5 // pred_fallthru
        _
      %p126 = scmp.lt.s32.totalorder %s17, 2
      // Predicated region
      $region13: #{tpu_custom_call.1} parent=5 // pred_check
        %p127 = pneg %p126
      $region14: #{tpu_custom_call.1} parent=5 // pred_check_branch
        %129 = sbr.rel (%p127) target = $region16
      $region15: #{tpu_custom_call.1} parent=5 // pred_region
        // Predicated region
        $region17: #{tpu_custom_call.1} parent=15 // pred_check
          %p130 = pneg %p51
        $region18: #{tpu_custom_call.1} parent=15 // pred_check_branch
          %132 = sbr.rel (%p130) target = $region20
        $region19: #{tpu_custom_call.1} parent=15 // pred_region
          %s133 = sand.u32 %s41, 1
          %s134 = scalar_lea.sflag [#allocation3], %s133
          %s135 = sand.u32 %s41, 1
          %s136 = smul.addr %s135, 8
          %s137 = scalar_lea.vmem [#allocation2], %s136
          %s138 = sadd.s32 %s24, %s25
          %s140 = ssub.s32 128, 128
          %141 = vsyncadd %s134, %s140
          %s142 = smul.addr %s138, 128
          %s143 = scalar_lea.hbm %s0, %s142
          %s145 = sshll.u32 %s137, 4
          %s146 = int_to_ptr.vmem [resolvable:$true] %s145
          %148 = dma.hbm_to_vmem [thread:$0]  %s143, 128, %s146, %s134
        $region20: #{tpu_custom_call.1} parent=15 // pred_fallthru
          _
        // Predicated region
        $region21: #{tpu_custom_call.1} parent=15 // pred_check
          %p149 = pneg %p79
        $region22: #{tpu_custom_call.1} parent=15 // pred_check_branch
          %151 = sbr.rel (%p149) target = $region24
        $region23: #{tpu_custom_call.1} parent=15 // pred_region
          %s152 = sand.u32 %s69, 1
          %s153 = scalar_lea.sflag [#allocation6], %s152
          %s154 = sand.u32 %s69, 1
          %s155 = smul.addr %s154, 8
          %s156 = scalar_lea.vmem [#allocation5], %s155
          %s157 = sadd.s32 %s24, %s25
          %s159 = ssub.s32 128, 128
          %160 = vsyncadd %s153, %s159
          %s161 = smul.addr %s157, 128
          %s162 = scalar_lea.hbm %s1, %s161
          %s164 = sshll.u32 %s156, 4
          %s165 = int_to_ptr.vmem [resolvable:$true] %s164
          %167 = dma.hbm_to_vmem [thread:$0]  %s162, 128, %s165, %s153
        $region24: #{tpu_custom_call.1} parent=15 // pred_fallthru
          _
      $region16: #{tpu_custom_call.1} parent=5 // pred_fallthru
        _
      %p168 = scmp.le.s32.totalorder 1, %s17
      %p169 = scmp.lt.s32.totalorder %s17, 3
      %p170 = pnand %p168, %p169
      %p171 = pneg %p170
      // Predicated region
      $region25: #{tpu_custom_call.1} parent=5 // pred_check
        _
      $region26: #{tpu_custom_call.1} parent=5 // pred_check_branch
        %173 = sbr.rel (%p170) target = $region28
      $region27: #{tpu_custom_call.1} parent=5 // pred_region
        %s174 = ssub.s32 %s17, 1
        %s175 = sand.u32 %s44, 1
        %s176 = scalar_lea.sflag [#allocation3], %s175
        %s177 = sand.u32 %s44, 1
        %s178 = smul.addr %s177, 8
        %s179 = scalar_lea.vmem [#allocation2], %s178
        // Predicated region
        $region29: #{tpu_custom_call.1} parent=27 // pred_check
          %p180 = pneg %p57
        $region30: #{tpu_custom_call.1} parent=27 // pred_check_branch
          %182 = sbr.rel (%p180) target = $region32
        $region31: #{tpu_custom_call.1} parent=27 // pred_region
          %183 = dma.done %s176, 128
        $region32: #{tpu_custom_call.1} parent=27 // pred_fallthru
          _
        %s184 = sand.u32 %s72, 1
        %s185 = scalar_lea.sflag [#allocation6], %s184
        %s186 = sand.u32 %s72, 1
        %s187 = smul.addr %s186, 8
        %s188 = scalar_lea.vmem [#allocation5], %s187
        // Predicated region
        $region33: #{tpu_custom_call.1} parent=27 // pred_check
          %p189 = pneg %p85
        $region34: #{tpu_custom_call.1} parent=27 // pred_check_branch
          %191 = sbr.rel (%p189) target = $region36
        $region35: #{tpu_custom_call.1} parent=27 // pred_region
          %192 = dma.done %s185, 128
        $region36: #{tpu_custom_call.1} parent=27 // pred_fallthru
          _
        %s193 = sand.u32 %s44, 1
        %s194 = scalar_lea.sflag [#allocation3], %s193
        %s195 = sand.u32 %s44, 1
        %s196 = smul.addr %s195, 8
        %s197 = scalar_lea.vmem [#allocation2], %s196
        %p198 = pneg %p57
        %p199 = pneg %p54
        %s200 = sand.u32 %s72, 1
        %s201 = scalar_lea.sflag [#allocation6], %s200
        %s202 = sand.u32 %s72, 1
        %s203 = smul.addr %s202, 8
        %s204 = scalar_lea.vmem [#allocation5], %s203
        %p205 = pneg %p85
        %p206 = pneg %p82
        %p207 = pneg %p111
        %p208 = pneg %p108
        %s209 = sand.u32 %s98, 1
        %s210 = scalar_lea.sflag [#allocation4], %s209
        %s211 = sand.u32 %s98, 1
        %s212 = smul.addr %s211, 8
        %s213 = scalar_lea.vmem [#allocation7], %s212
        %s214 = sadd.s32 %s26, %s27
        %s215 = sadd.s32 %s26, %s27
        %p216 = scmp.eq.s32.totalorder %s27, 0
        // Predicated region
        $region37: #{tpu_custom_call.1} parent=27 // pred_check
          %p217 = pneg %p216
        $region38: #{tpu_custom_call.1} parent=27 // pred_check_branch
          %219 = sbr.rel (%p217) target = $region40
        $region39: #{tpu_custom_call.1} parent=27 // pred_region
          %220 = vst [vmem:[%s213] sm:$0xff] 0.0
        $region40: #{tpu_custom_call.1} parent=27 // pred_fallthru
          _
        %v221 = vld [vmem:[%s179] sm:$0xff]
        %v222 = vmax.f32 %v221, 1e-08
        %v223 = vmin.f32 %v222, 1.0
        %v224 = vld [vmem:[%s188] sm:$0xff]
        %v225 = vmax.f32 %v224, 1e-08
        %v226 = vsub.f32 0.0, %v223
        %v227 = vmul.f32 %v226, 1.442695
        %v228 = vpow.pop %v227
        %v229 = vadd.f32 %v228, 1.0
        %v230 = vrcp.pop %v229
        %v231 = vlog2.pop %v229
        %v232 = vmul.f32 %v231, 0.6931472
        %v233 = vmul.f32 %v228, %v230
        %v234 = vmul.f32 %v233, %v233
        %v235 = vmul.f32 %v234, %v225
        %v236 = vmul.f32 %v235, %v232
        %v237 = vmul.f32 %v230, %v230
        %v238 = vsub.f32 1.0, %v225
        %v239 = vmul.f32 %v237, %v238
        %v240 = vadd.f32 %v223, %v232
        %v241 = vmul.f32 %v239, %v240
        %v242 = vadd.f32 %v236, %v241
        %v243 = vld [vmem:[%s213] sm:$0xff]
        %v244 = vadd.f32 %v242, 0.0
        %v245 = vadd.f32 %v243, %v244
        %246 = vst [vmem:[%s213] sm:$0xff] %v245
        %s247 = sand.u32 %s98, 1
        %s248 = scalar_lea.sflag [#allocation4], %s247
        %s249 = sand.u32 %s98, 1
        %s250 = smul.addr %s249, 8
        %s251 = scalar_lea.vmem [#allocation7], %s250
        // Predicated region
        $region41: #{tpu_custom_call.1} parent=27 // pred_check
          %p252 = pneg %p108
        $region42: #{tpu_custom_call.1} parent=27 // pred_check_branch
          %254 = sbr.rel (%p252) target = $region44
        $region43: #{tpu_custom_call.1} parent=27 // pred_region
          %s256 = ssub.s32 128, 128
          %257 = vsyncadd %s248, %s256
          %s258 = smul.addr %s26, 128
          %s259 = scalar_lea.hbm %s2, %s258
          %s261 = sshll.u32 %s251, 4
          %s262 = int_to_ptr.vmem [resolvable:$true] %s261
          %264 = dma.vmem_to_hbm [thread:$0]  %s262, 128, %s259, %s248
        $region44: #{tpu_custom_call.1} parent=27 // pred_fallthru
          _
      $region28: #{tpu_custom_call.1} parent=5 // pred_fallthru
        _
      %p265 = scmp.le.s32.totalorder 2, %s17
      // Predicated region
      $region45: #{tpu_custom_call.1} parent=5 // pred_check
        %p266 = pneg %p265
      $region46: #{tpu_custom_call.1} parent=5 // pred_check_branch
        %268 = sbr.rel (%p266) target = $region48
      $region47: #{tpu_custom_call.1} parent=5 // pred_region
        %s269 = ssub.s32 %s17, 2
        // Predicated region
        $region49: #{tpu_custom_call.1} parent=47 // pred_check
          %p270 = pneg %p114
        $region50: #{tpu_custom_call.1} parent=47 // pred_check_branch
          %272 = sbr.rel (%p270) target = $region52
        $region51: #{tpu_custom_call.1} parent=47 // pred_region
          %s273 = sand.u32 %s99, 1
          %s274 = scalar_lea.sflag [#allocation4], %s273
          %s275 = sand.u32 %s99, 1
          %s276 = smul.addr %s275, 8
          %s277 = scalar_lea.vmem [#allocation7], %s276
          %278 = dma.done %s274, 128
        $region52: #{tpu_custom_call.1} parent=47 // pred_fallthru
          _
      $region48: #{tpu_custom_call.1} parent=5 // pred_fallthru
        _
    $region6: #{tpu_custom_call.1} parent=1 // loop_footer
      %s21 = sadd.s32 1, %s17
    $region7: #{tpu_custom_call.1} parent=1 // loop_footer_branch
      %16 = sbr.rel target = $region3
    $region8: #{tpu_custom_call.1} parent=1 // loop_exit
      _
    %279 = vsyncpa [#allocation3], 1
    %s280 = scalar_lea.sflag [#allocation3], 1
    %281 = vsyncpa %s280, 1
    %282 = vsyncpa [#allocation6], 1
    %s283 = scalar_lea.sflag [#allocation6], 1
    %284 = vsyncpa %s283, 1
    %285 = vsyncpa [#allocation4], 1
    %s286 = scalar_lea.sflag [#allocation4], 1
    %287 = vsyncpa %s286, 1

</llo_original>
